<compile_context>
chip_gen: v7x
topology: tpu7x:2x2x1
jax: 0.10.0
libtpu: 0.0.40
codegen_flags: <defaults>
</compile_context>

<pallas_src>
import jax
import jax.numpy as jnp
from jax.experimental import pallas as pl
from jax.experimental.pallas import tpu as pltpu

BN_EPS = 1e-5


def _round_up(a, m):
    return (a + m - 1) // m * m


def _make_conv_stats_kernel(k, wp, c_in, p_pad):
    """Pass 1: folded-tap conv over the flat padded grid + masked BN partial stats."""

    def kernel(x_ref, w_ref, vmask_ref, y_ref, stats_ref, slab_ref):
        # x_ref:     (1, C_in, P_in)      one sample, zero-padded image, spatial flattened
        # w_ref:     (C_out, K*K*C_in)    folded weights, tap-major (kh, kw, ci)
        # vmask_ref: (1, P_pad)           1.0 where a flat column is a real conv output
        # y_ref:     (1, C_out, P_pad)    conv over the padded grid (lane-dense, 128-mult)
        # stats_ref: (1, C_out, 2)        [masked sum, masked sum of squares]
        # slab_ref:  (K*K*C_in, P_pad)    VMEM scratch: folded contraction slab
        xa = x_ref[0]                                        # (C_in, P_in), read once
        t = 0
        for kh in range(k):                                  # K*K = small static unroll
            for kw in range(k):
                off = kh * wp + kw                           # static lane offset of tap
                slab_ref[t * c_in:(t + 1) * c_in, :] = xa[:, off:off + p_pad]
                t += 1
        # One deep MXU matmul (contraction depth K*K*C_in) replaces K^2 shallow dots
        # plus K^2-1 full (C_out, P) VALU adds.
        acc = jnp.dot(w_ref[...], slab_ref[...],
                      preferred_element_type=jnp.float32)    # (C_out, P_pad), f32
        y_ref[0] = acc.astype(y_ref.dtype)                   # unmasked lane-dense store
        vm = vmask_ref[...]                                  # (1, P_pad)
        masked = acc * vm                                    # computed once, reused
        s1 = jnp.sum(masked, axis=1, keepdims=True)          # (C_out, 1)
        s2 = jnp.sum(masked * acc, axis=1, keepdims=True)    # (C_out, 1)
        stats_ref[0] = jnp.concatenate([s1, s2], axis=1)     # single tiny store / DMA

    return kernel


def _make_bn_compact_kernel(wp, stride, h_out, w_out):
    """Pass 2: fused BN-apply + compaction (flat padded grid -> (C_out, Ho*Wo))."""

    def kernel(y_ref, scale_ref, shift_ref, o_ref):
        # y_ref:       (1, C_out, P_pad)   f32 conv output over the flat padded grid
        # scale/shift: (C_out, 1)          folded BN params
        # o_ref:       (1, C_out, Ho*Wo)   lane-dense compacted + normalized output
        rows = []
        if stride == 1:
            ya = y_ref[0]                                    # (C_out, P_pad)
            for ho in range(h_out):
                base = ho * wp
                rows.append(ya[:, base:base + w_out])        # contiguous valid row
        else:
            # TODO(synk): stride>1 is better served by a polyphase layout that makes
            # every computed column valid; here we just gather the valid columns.
            for ho in range(h_out):
                base = ho * stride * wp
                rows.append(y_ref[0, :, pl.ds(base, w_out, stride=stride)])
        yv = jnp.concatenate(rows, axis=1)                   # (C_out, Ho*Wo)
        o_ref[0] = yv * scale_ref[...] + shift_ref[...]      # single lane-dense store

    return kernel


def conv_kxbn(x_nchw, weight, gamma, beta, *, stride,
              mxu_dtype=jnp.float32, vmem_limit_mb=64):
    """Pallas implementation of ConvKXBN.forward (conv -> training-mode BatchNorm).

    x_nchw : (N, C_in, H, W) float32
    weight : (C_out, C_in, K, K)  (PyTorch OIHW, bias=False)
    gamma, beta : (C_out,) BatchNorm affine params
    """
    n, c_in, h, w = x_nchw.shape
    c_out, c_in_w, kh_, kw_ = weight.shape
    assert c_in == c_in_w and kh_ == kw_
    k = kh_
    pad = (k - 1) // 2
    hp, wp = h + 2 * pad, w + 2 * pad
    h_out = (hp - k) // stride + 1
    w_out = (wp - k) // stride + 1
    # Conv is evaluated on the flattened padded grid; output (ho, wo) lives at flat
    # column ho*stride*wp + wo*stride.  Pad the span to a multiple of 128 (lane-dense).
    p_span = (h_out - 1) * stride * wp + (w_out - 1) * stride + 1
    p_pad = _round_up(p_span, 128)
    off_max = (k - 1) * wp + (k - 1)
    p_in = max(hp * wp, off_max + p_pad)       # all in-kernel tap reads stay in-bounds

    # ---- wrapper glue (fuses into one XLA op under jit): zero-pad, flatten, cast ------
    x_pad = jnp.pad(x_nchw, ((0, 0), (0, 0), (pad, pad), (pad, pad)))
    x_flat = x_pad.reshape(n, c_in, hp * wp)
    if p_in > hp * wp:
        x_flat = jnp.pad(x_flat, ((0, 0), (0, 0), (0, p_in - hp * wp)))
    x_flat = x_flat.astype(mxu_dtype)
    # OIHW -> (C_out, K*K*C_in), tap-major (kh, kw, ci) to match the in-kernel slab.
    w_fold = jnp.transpose(weight, (0, 2, 3, 1)).reshape(c_out, k * k * c_in)
    w_fold = w_fold.astype(mxu_dtype)

    # Valid-output mask over the flat padded grid.
    j = jnp.arange(p_pad, dtype=jnp.int32)
    row, col = j // wp, j % wp
    valid = ((j < p_span) & (row % stride == 0) & (col % stride == 0)
             & (col <= (w_out - 1) * stride))
    vmask = valid.astype(jnp.float32).reshape(1, p_pad)

    vmem_limit = vmem_limit_mb * 1024 * 1024
    itemsize = jnp.dtype(mxu_dtype).itemsize
    cost1 = pl.CostEstimate(
        flops=2 * n * c_out * p_pad * (k * k * c_in) + 4 * n * c_out * p_pad,
        transcendentals=0,
        bytes_accessed=(n * c_in * p_in * itemsize + c_out * k * k * c_in * itemsize
                        + p_pad * 4 + n * c_out * (p_pad + 2) * 4))

    # TODO(synk): for very large early layers on v7x, add a second grid axis tiling
    # P_pad (with a (K-1)*wp + K halo on the x window) to bound VMEM and use both TCs
    # when N is 1; per-sample blocks are sufficient for the shapes exercised here.
    conv_flat, stats = pl.pallas_call(
        _make_conv_stats_kernel(k, wp, c_in, p_pad),
        out_shape=(
            jax.ShapeDtypeStruct((n, c_out, p_pad), jnp.float32),
            jax.ShapeDtypeStruct((n, c_out, 2), jnp.float32),
        ),
        grid=(n,),
        in_specs=[
            pl.BlockSpec((1, c_in, p_in), lambda i: (i, 0, 0)),
            pl.BlockSpec((c_out, k * k * c_in), lambda i: (0, 0)),
            pl.BlockSpec((1, p_pad), lambda i: (0, 0)),
        ],
        out_specs=(
            pl.BlockSpec((1, c_out, p_pad), lambda i: (i, 0, 0)),
            pl.BlockSpec((1, c_out, 2), lambda i: (i, 0, 0)),
        ),
        scratch_shapes=[pltpu.VMEM((k * k * c_in, p_pad), mxu_dtype)],
        compiler_params=pltpu.CompilerParams(
            dimension_semantics=("parallel",), vmem_limit_bytes=vmem_limit),
        cost_estimate=cost1,
    )(x_flat, w_fold, vmask)

    # ---- fold global BN stats (tiny per-channel math, all f32) ------------------------
    count = n * h_out * w_out
    tot = jnp.sum(stats[:, :, 0], axis=0)                     # (C_out,)
    tot2 = jnp.sum(stats[:, :, 1], axis=0)
    mean = tot / count
    # Biased variance (BN training forward).  E[x^2]-mean^2 is cancellation-prone for
    # |mean| >> std; clamp prevents NaN (a centered pass would need re-reading conv_flat).
    var = jnp.maximum(tot2 / count - mean * mean, 0.0)
    inv = jax.lax.rsqrt(var + BN_EPS)
    g = gamma.astype(jnp.float32)
    b = beta.astype(jnp.float32)
    scale = (g * inv).reshape(c_out, 1)
    shift = (b - mean * g * inv).reshape(c_out, 1)

    # ---- pass 2: fused BN-apply + compaction (no wrapper pad/reshape/strided slice) ---
    m_out = h_out * w_out
    cost2 = pl.CostEstimate(
        flops=2 * n * c_out * m_out, transcendentals=0,
        bytes_accessed=n * c_out * (p_pad + m_out) * 4 + 2 * c_out * 4)
    y_flat = pl.pallas_call(
        _make_bn_compact_kernel(wp, stride, h_out, w_out),
        out_shape=jax.ShapeDtypeStruct((n, c_out, m_out), jnp.float32),
        grid=(n,),
        in_specs=[
            pl.BlockSpec((1, c_out, p_pad), lambda i: (i, 0, 0)),
            pl.BlockSpec((c_out, 1), lambda i: (0, 0)),
            pl.BlockSpec((c_out, 1), lambda i: (0, 0)),
        ],
        out_specs=pl.BlockSpec((1, c_out, m_out), lambda i: (i, 0, 0)),
        compiler_params=pltpu.CompilerParams(
            dimension_semantics=("parallel",), vmem_limit_bytes=vmem_limit),
        cost_estimate=cost2,
    )(conv_flat, scale, shift)

    # Free reshape of contiguous trailing dims -> (N, C_out, H_out, W_out).
    return y_flat.reshape(n, c_out, h_out, w_out)


def conv_kxbn_ref(x, weight, gamma, beta, *, stride):
    """Pure-JAX reference (conv + training-mode BatchNorm)."""
    pad = (weight.shape[-1] - 1) // 2
    conv = jax.lax.conv_general_dilated(
        x.astype(jnp.float32), weight.astype(jnp.float32),
        window_strides=(stride, stride),
        padding=((pad, pad), (pad, pad)),
        dimension_numbers=("NCHW", "OIHW", "NCHW"))
    mean = conv.mean(axis=(0, 2, 3), keepdims=True)
    var = jnp.square(conv - mean).mean(axis=(0, 2, 3), keepdims=True)
    g = gamma.reshape(1, -1, 1, 1)
    b = beta.reshape(1, -1, 1, 1)
    return (conv - mean) * jax.lax.rsqrt(var + BN_EPS) * g + b


if __name__ == "__main__":
    key = jax.random.PRNGKey(0)
    kx, kw_, kg, kb = jax.random.split(key, 4)

    # ConvKXBN(in_c=4, out_c=8, kernel_size=3, stride=1)
    N, C_IN, H, W = 2, 4, 16, 16
    C_OUT, K, STRIDE = 8, 3, 1

    x = jax.random.normal(kx, (N, C_IN, H, W), jnp.float32)
    weight = jax.random.normal(kw_, (C_OUT, C_IN, K, K), jnp.float32) * 0.1
    gamma = 1.0 + 0.1 * jax.random.normal(kg, (C_OUT,), jnp.float32)
    beta = 0.1 * jax.random.normal(kb, (C_OUT,), jnp.float32)

    fn = jax.jit(conv_kxbn, static_argnames=("stride",))
    out = jax.block_until_ready(fn(x, weight, gamma, beta, stride=STRIDE))

    ref = conv_kxbn_ref(x, weight, gamma, beta, stride=STRIDE)
    assert out.shape == (N, C_OUT, H, W)
    err = float(jnp.abs(out - ref).max())
    assert jnp.allclose(out, ref, atol=1e-4, rtol=1e-4), err
    # TODO(synk): nn.BatchNorm2d running_mean/running_var buffer updates (training-time
    # side effect) are not represented; only the returned tensor is reproduced.
    print("KERNEL_OK")
</pallas_src>

<mosaic_0001>
module attributes {stable_mosaic.version = 11 : i64} {
  func.func @kernel(%arg0: i32, %arg1: memref<1x4x422xf32, #tpu.memory_space<vmem>>, %arg2: memref<8x36xf32, #tpu.memory_space<vmem>>, %arg3: memref<1x384xf32, #tpu.memory_space<vmem>>, %arg4: memref<1x8x384xf32, #tpu.memory_space<vmem>>, %arg5: memref<1x8x2xf32, #tpu.memory_space<vmem>>, %arg6: memref<36x384xf32, #tpu.memory_space<vmem>>) attributes {dimension_semantics = [#tpu.dimension_semantics<parallel>], iteration_bounds = array<i64: 2>, scalar_prefetch = 0 : i64, scratch_operands = 1 : i64, tpu.core_type = #tpu.core_type<tc>, window_params = [{transform_indices = @transform_0, window_bounds = array<i64: 1, 4, 422>}, {pipeline_mode = #tpu.pipeline_mode<synchronous>, transform_indices = @transform_1, window_bounds = array<i64: 8, 36>}, {pipeline_mode = #tpu.pipeline_mode<synchronous>, transform_indices = @transform_2, window_bounds = array<i64: 1, 384>}, {transform_indices = @transform_3, window_bounds = array<i64: 1, 8, 384>}, {transform_indices = @transform_4, window_bounds = array<i64: 1, 8, 2>}]} {
    %c0 = arith.constant 0 : index
    %c0_0 = arith.constant 0 : index
    %c0_1 = arith.constant 0 : index
    %0 = vector.load %arg1[%c0, %c0_0, %c0_1] : memref<1x4x422xf32, #tpu.memory_space<vmem>>, vector<1x4x422xf32>
    %1 = vector.shape_cast %0 : vector<1x4x422xf32> to vector<4x422xf32>
    %2 = vector.extract_strided_slice %1 {offsets = [0, 0], sizes = [4, 384], strides = [1, 1]} : vector<4x422xf32> to vector<4x384xf32>
    %c0_2 = arith.constant 0 : index
    %c0_3 = arith.constant 0 : index
    %3 = vector.load %arg6[%c0_2, %c0_3] : memref<36x384xf32, #tpu.memory_space<vmem>>, vector<4x384xf32>
    tpu.vector_store %arg6[%c0_2, %c0_3], %2 {strides = array<i32>} : memref<36x384xf32, #tpu.memory_space<vmem>>, vector<4x384xf32>,
    %4 = vector.extract_strided_slice %1 {offsets = [0, 1], sizes = [4, 384], strides = [1, 1]} : vector<4x422xf32> to vector<4x384xf32>
    %c4 = arith.constant 4 : index
    %c0_4 = arith.constant 0 : index
    %5 = vector.load %arg6[%c4, %c0_4] : memref<36x384xf32, #tpu.memory_space<vmem>>, vector<4x384xf32>
    tpu.vector_store %arg6[%c4, %c0_4], %4 {strides = array<i32>} : memref<36x384xf32, #tpu.memory_space<vmem>>, vector<4x384xf32>,
    %6 = vector.extract_strided_slice %1 {offsets = [0, 2], sizes = [4, 384], strides = [1, 1]} : vector<4x422xf32> to vector<4x384xf32>
    %c8 = arith.constant 8 : index
    %c0_5 = arith.constant 0 : index
    %7 = vector.load %arg6[%c8, %c0_5] : memref<36x384xf32, #tpu.memory_space<vmem>>, vector<4x384xf32>
    tpu.vector_store %arg6[%c8, %c0_5], %6 {strides = array<i32>} : memref<36x384xf32, #tpu.memory_space<vmem>>, vector<4x384xf32>,
    %8 = vector.extract_strided_slice %1 {offsets = [0, 18], sizes = [4, 384], strides = [1, 1]} : vector<4x422xf32> to vector<4x384xf32>
    %c12 = arith.constant 12 : index
    %c0_6 = arith.constant 0 : index
    %9 = vector.load %arg6[%c12, %c0_6] : memref<36x384xf32, #tpu.memory_space<vmem>>, vector<4x384xf32>
    tpu.vector_store %arg6[%c12, %c0_6], %8 {strides = array<i32>} : memref<36x384xf32, #tpu.memory_space<vmem>>, vector<4x384xf32>,
    %10 = vector.extract_strided_slice %1 {offsets = [0, 19], sizes = [4, 384], strides = [1, 1]} : vector<4x422xf32> to vector<4x384xf32>
    %c16 = arith.constant 16 : index
    %c0_7 = arith.constant 0 : index
    %11 = vector.load %arg6[%c16, %c0_7] : memref<36x384xf32, #tpu.memory_space<vmem>>, vector<4x384xf32>
    tpu.vector_store %arg6[%c16, %c0_7], %10 {strides = array<i32>} : memref<36x384xf32, #tpu.memory_space<vmem>>, vector<4x384xf32>,
    %12 = vector.extract_strided_slice %1 {offsets = [0, 20], sizes = [4, 384], strides = [1, 1]} : vector<4x422xf32> to vector<4x384xf32>
    %c20 = arith.constant 20 : index
    %c0_8 = arith.constant 0 : index
    %13 = vector.load %arg6[%c20, %c0_8] : memref<36x384xf32, #tpu.memory_space<vmem>>, vector<4x384xf32>
    tpu.vector_store %arg6[%c20, %c0_8], %12 {strides = array<i32>} : memref<36x384xf32, #tpu.memory_space<vmem>>, vector<4x384xf32>,
    %14 = vector.extract_strided_slice %1 {offsets = [0, 36], sizes = [4, 384], strides = [1, 1]} : vector<4x422xf32> to vector<4x384xf32>
    %c24 = arith.constant 24 : index
    %c0_9 = arith.constant 0 : index
    %15 = vector.load %arg6[%c24, %c0_9] : memref<36x384xf32, #tpu.memory_space<vmem>>, vector<4x384xf32>
    tpu.vector_store %arg6[%c24, %c0_9], %14 {strides = array<i32>} : memref<36x384xf32, #tpu.memory_space<vmem>>, vector<4x384xf32>,
    %16 = vector.extract_strided_slice %1 {offsets = [0, 37], sizes = [4, 384], strides = [1, 1]} : vector<4x422xf32> to vector<4x384xf32>
    %c28 = arith.constant 28 : index
    %c0_10 = arith.constant 0 : index
    %17 = vector.load %arg6[%c28, %c0_10] : memref<36x384xf32, #tpu.memory_space<vmem>>, vector<4x384xf32>
    tpu.vector_store %arg6[%c28, %c0_10], %16 {strides = array<i32>} : memref<36x384xf32, #tpu.memory_space<vmem>>, vector<4x384xf32>,
    %18 = vector.extract_strided_slice %1 {offsets = [0, 38], sizes = [4, 384], strides = [1, 1]} : vector<4x422xf32> to vector<4x384xf32>
    %c32 = arith.constant 32 : index
    %c0_11 = arith.constant 0 : index
    %19 = vector.load %arg6[%c32, %c0_11] : memref<36x384xf32, #tpu.memory_space<vmem>>, vector<4x384xf32>
    tpu.vector_store %arg6[%c32, %c0_11], %18 {strides = array<i32>} : memref<36x384xf32, #tpu.memory_space<vmem>>, vector<4x384xf32>,
    %c0_12 = arith.constant 0 : index
    %c0_13 = arith.constant 0 : index
    %20 = vector.load %arg2[%c0_12, %c0_13] : memref<8x36xf32, #tpu.memory_space<vmem>>, vector<8x36xf32>
    %c0_14 = arith.constant 0 : index
    %c0_15 = arith.constant 0 : index
    %21 = vector.load %arg6[%c0_14, %c0_15] : memref<36x384xf32, #tpu.memory_space<vmem>>, vector<36x384xf32>
    %cst = arith.constant dense<0.000000e+00> : vector<8x384xf32>
    %22 = tpu.matmul %20, %21, %cst {dimension_numbers = #tpu.dot_dimension_numbers<[1], [0], [0], [1], [0, 0, 1, 1], [], []>} : vector<8x36xf32>, vector<36x384xf32>, vector<8x384xf32> -> vector<8x384xf32>
    %c0_16 = arith.constant 0 : index
    %c0_17 = arith.constant 0 : index
    %c0_18 = arith.constant 0 : index
    %23 = vector.load %arg4[%c0_16, %c0_17, %c0_18] : memref<1x8x384xf32, #tpu.memory_space<vmem>>, vector<1x8x384xf32>
    %24 = vector.shape_cast %23 : vector<1x8x384xf32> to vector<8x384xf32>
    %25 = vector.shape_cast %22 : vector<8x384xf32> to vector<1x8x384xf32>
    tpu.vector_store %arg4[%c0_16, %c0_17, %c0_18], %25 {strides = array<i32>} : memref<1x8x384xf32, #tpu.memory_space<vmem>>, vector<1x8x384xf32>,
    %c0_19 = arith.constant 0 : index
    %c0_20 = arith.constant 0 : index
    %26 = vector.load %arg3[%c0_19, %c0_20] : memref<1x384xf32, #tpu.memory_space<vmem>>, vector<1x384xf32>
    %27 = vector.broadcast %26 : vector<1x384xf32> to vector<8x384xf32>
    %28 = arith.mulf %22, %27 : vector<8x384xf32>
    %cst_21 = arith.constant dense<0.000000e+00> : vector<8xf32>
    %29 = vector.multi_reduction <add>, %28, %cst_21 [1] : vector<8x384xf32> to vector<8xf32>
    %30 = vector.shape_cast %29 : vector<8xf32> to vector<8x1xf32>
    %31 = arith.mulf %28, %22 : vector<8x384xf32>
    %cst_22 = arith.constant dense<0.000000e+00> : vector<8xf32>
    %32 = vector.multi_reduction <add>, %31, %cst_22 [1] : vector<8x384xf32> to vector<8xf32>
    %33 = vector.shape_cast %32 : vector<8xf32> to vector<8x1xf32>
    %34 = tpu.concatenate %30, %33 in 1 : vector<8x1xf32>, vector<8x1xf32> -> vector<8x2xf32>
    %c0_23 = arith.constant 0 : index
    %c0_24 = arith.constant 0 : index
    %c0_25 = arith.constant 0 : index
    %35 = vector.load %arg5[%c0_23, %c0_24, %c0_25] : memref<1x8x2xf32, #tpu.memory_space<vmem>>, vector<1x8x2xf32>
    %36 = vector.shape_cast %35 : vector<1x8x2xf32> to vector<8x2xf32>
    %37 = vector.shape_cast %34 : vector<8x2xf32> to vector<1x8x2xf32>
    tpu.vector_store %arg5[%c0_23, %c0_24, %c0_25], %37 {strides = array<i32>} : memref<1x8x2xf32, #tpu.memory_space<vmem>>, vector<1x8x2xf32>,
    return
  }
  func.func @transform_0(%arg0: i32) -> (i32, i32, i32) {
    %c0_i32 = arith.constant 0 : i32
    %c0_i32_0 = arith.constant 0 : i32
    %c0_i32_1 = arith.constant 0 : i32
    return %arg0, %c0_i32, %c0_i32_0 : i32, i32, i32
  }
  func.func @transform_1(%arg0: i32) -> (i32, i32) {
    %c0_i32 = arith.constant 0 : i32
    %c0_i32_0 = arith.constant 0 : i32
    %c0_i32_1 = arith.constant 0 : i32
    return %c0_i32, %c0_i32_0 : i32, i32
  }
  func.func @transform_2(%arg0: i32) -> (i32, i32) {
    %c0_i32 = arith.constant 0 : i32
    %c0_i32_0 = arith.constant 0 : i32
    %c0_i32_1 = arith.constant 0 : i32
    return %c0_i32, %c0_i32_0 : i32, i32
  }
  func.func @transform_3(%arg0: i32) -> (i32, i32, i32) {
    %c0_i32 = arith.constant 0 : i32
    %c0_i32_0 = arith.constant 0 : i32
    %c0_i32_1 = arith.constant 0 : i32
    return %arg0, %c0_i32, %c0_i32_0 : i32, i32, i32
  }
  func.func @transform_4(%arg0: i32) -> (i32, i32, i32) {
    %c0_i32 = arith.constant 0 : i32
    %c0_i32_0 = arith.constant 0 : i32
    %c0_i32_1 = arith.constant 0 : i32
    return %arg0, %c0_i32, %c0_i32_0 : i32, i32, i32
  }
}

module attributes {stable_mosaic.version = 11 : i64} {
  func.func @kernel(%arg0: i32, %arg1: memref<1x8x384xf32, #tpu.memory_space<vmem>>, %arg2: memref<8x1xf32, #tpu.memory_space<vmem>>, %arg3: memref<8x1xf32, #tpu.memory_space<vmem>>, %arg4: memref<1x8x256xf32, #tpu.memory_space<vmem>>) attributes {dimension_semantics = [#tpu.dimension_semantics<parallel>], iteration_bounds = array<i64: 2>, scalar_prefetch = 0 : i64, scratch_operands = 0 : i64, tpu.core_type = #tpu.core_type<tc>, window_params = [{transform_indices = @transform_0, window_bounds = array<i64: 1, 8, 384>}, {pipeline_mode = #tpu.pipeline_mode<synchronous>, transform_indices = @transform_1, window_bounds = array<i64: 8, 1>}, {pipeline_mode = #tpu.pipeline_mode<synchronous>, transform_indices = @transform_2, window_bounds = array<i64: 8, 1>}, {transform_indices = @transform_3, window_bounds = array<i64: 1, 8, 256>}]} {
    %c0 = arith.constant 0 : index
    %c0_0 = arith.constant 0 : index
    %c0_1 = arith.constant 0 : index
    %0 = vector.load %arg1[%c0, %c0_0, %c0_1] : memref<1x8x384xf32, #tpu.memory_space<vmem>>, vector<1x8x384xf32>
    %1 = vector.shape_cast %0 : vector<1x8x384xf32> to vector<8x384xf32>
    %2 = vector.extract_strided_slice %1 {offsets = [0, 0], sizes = [8, 16], strides = [1, 1]} : vector<8x384xf32> to vector<8x16xf32>
    %3 = vector.extract_strided_slice %1 {offsets = [0, 18], sizes = [8, 16], strides = [1, 1]} : vector<8x384xf32> to vector<8x16xf32>
    %4 = vector.extract_strided_slice %1 {offsets = [0, 36], sizes = [8, 16], strides = [1, 1]} : vector<8x384xf32> to vector<8x16xf32>
    %5 = vector.extract_strided_slice %1 {offsets = [0, 54], sizes = [8, 16], strides = [1, 1]} : vector<8x384xf32> to vector<8x16xf32>
    %6 = vector.extract_strided_slice %1 {offsets = [0, 72], sizes = [8, 16], strides = [1, 1]} : vector<8x384xf32> to vector<8x16xf32>
    %7 = vector.extract_strided_slice %1 {offsets = [0, 90], sizes = [8, 16], strides = [1, 1]} : vector<8x384xf32> to vector<8x16xf32>
    %8 = vector.extract_strided_slice %1 {offsets = [0, 108], sizes = [8, 16], strides = [1, 1]} : vector<8x384xf32> to vector<8x16xf32>
    %9 = vector.extract_strided_slice %1 {offsets = [0, 126], sizes = [8, 16], strides = [1, 1]} : vector<8x384xf32> to vector<8x16xf32>
    %10 = vector.extract_strided_slice %1 {offsets = [0, 144], sizes = [8, 16], strides = [1, 1]} : vector<8x384xf32> to vector<8x16xf32>
    %11 = vector.extract_strided_slice %1 {offsets = [0, 162], sizes = [8, 16], strides = [1, 1]} : vector<8x384xf32> to vector<8x16xf32>
    %12 = vector.extract_strided_slice %1 {offsets = [0, 180], sizes = [8, 16], strides = [1, 1]} : vector<8x384xf32> to vector<8x16xf32>
    %13 = vector.extract_strided_slice %1 {offsets = [0, 198], sizes = [8, 16], strides = [1, 1]} : vector<8x384xf32> to vector<8x16xf32>
    %14 = vector.extract_strided_slice %1 {offsets = [0, 216], sizes = [8, 16], strides = [1, 1]} : vector<8x384xf32> to vector<8x16xf32>
    %15 = vector.extract_strided_slice %1 {offsets = [0, 234], sizes = [8, 16], strides = [1, 1]} : vector<8x384xf32> to vector<8x16xf32>
    %16 = vector.extract_strided_slice %1 {offsets = [0, 252], sizes = [8, 16], strides = [1, 1]} : vector<8x384xf32> to vector<8x16xf32>
    %17 = vector.extract_strided_slice %1 {offsets = [0, 270], sizes = [8, 16], strides = [1, 1]} : vector<8x384xf32> to vector<8x16xf32>
    %18 = tpu.concatenate %2, %3, %4, %5, %6, %7, %8, %9, %10, %11, %12, %13, %14, %15, %16, %17 in 1 : vector<8x16xf32>, vector<8x16xf32>, vector<8x16xf32>, vector<8x16xf32>, vector<8x16xf32>, vector<8x16xf32>, vector<8x16xf32>, vector<8x16xf32>, vector<8x16xf32>, vector<8x16xf32>, vector<8x16xf32>, vector<8x16xf32>, vector<8x16xf32>, vector<8x16xf32>, vector<8x16xf32>, vector<8x16xf32> -> vector<8x256xf32>
    %c0_2 = arith.constant 0 : index
    %c0_3 = arith.constant 0 : index
    %19 = vector.load %arg2[%c0_2, %c0_3] : memref<8x1xf32, #tpu.memory_space<vmem>>, vector<8x1xf32>
    %20 = vector.broadcast %19 : vector<8x1xf32> to vector<8x256xf32>
    %21 = arith.mulf %18, %20 : vector<8x256xf32>
    %c0_4 = arith.constant 0 : index
    %c0_5 = arith.constant 0 : index
    %22 = vector.load %arg3[%c0_4, %c0_5] : memref<8x1xf32, #tpu.memory_space<vmem>>, vector<8x1xf32>
    %23 = vector.broadcast %22 : vector<8x1xf32> to vector<8x256xf32>
    %24 = arith.addf %21, %23 : vector<8x256xf32>
    %c0_6 = arith.constant 0 : index
    %c0_7 = arith.constant 0 : index
    %c0_8 = arith.constant 0 : index
    %25 = vector.load %arg4[%c0_6, %c0_7, %c0_8] : memref<1x8x256xf32, #tpu.memory_space<vmem>>, vector<1x8x256xf32>
    %26 = vector.shape_cast %25 : vector<1x8x256xf32> to vector<8x256xf32>
    %27 = vector.shape_cast %24 : vector<8x256xf32> to vector<1x8x256xf32>
    tpu.vector_store %arg4[%c0_6, %c0_7, %c0_8], %27 {strides = array<i32>} : memref<1x8x256xf32, #tpu.memory_space<vmem>>, vector<1x8x256xf32>,
    return
  }
  func.func @transform_0(%arg0: i32) -> (i32, i32, i32) {
    %c0_i32 = arith.constant 0 : i32
    %c0_i32_0 = arith.constant 0 : i32
    %c0_i32_1 = arith.constant 0 : i32
    return %arg0, %c0_i32, %c0_i32_0 : i32, i32, i32
  }
  func.func @transform_1(%arg0: i32) -> (i32, i32) {
    %c0_i32 = arith.constant 0 : i32
    %c0_i32_0 = arith.constant 0 : i32
    %c0_i32_1 = arith.constant 0 : i32
    return %c0_i32, %c0_i32_0 : i32, i32
  }
  func.func @transform_2(%arg0: i32) -> (i32, i32) {
    %c0_i32 = arith.constant 0 : i32
    %c0_i32_0 = arith.constant 0 : i32
    %c0_i32_1 = arith.constant 0 : i32
    return %c0_i32, %c0_i32_0 : i32, i32
  }
  func.func @transform_3(%arg0: i32) -> (i32, i32, i32) {
    %c0_i32 = arith.constant 0 : i32
    %c0_i32_0 = arith.constant 0 : i32
    %c0_i32_1 = arith.constant 0 : i32
    return %arg0, %c0_i32, %c0_i32_0 : i32, i32, i32
  }
}

</mosaic_0001>

<llo_original>
// kernel: conv_kxbn.3
$region0: #{conv_kxbn.3}
  #allocation0 [shape = 'u32[]', space=smem, size = 0x4, offset = 0x4, fixed_abs, tag = 'smem constant byte address 0x4 - core index']
  #allocation1 [shape = 'u32[144,128]{1,0:T(1,128)}', space=vmem, size = 0x12000, scoped, tag = 'internal scratch']
  %s0 = inlined_call_operand.hbm [shape: f32[2,8,384], index: 0, kind: input, shape index: {}]
  %s1 = inlined_call_operand.hbm [shape: f32[8,1], index: 1, kind: input, shape index: {}]
  %s2 = inlined_call_operand.hbm [shape: f32[8,1], index: 2, kind: input, shape index: {}]
  %s3 = inlined_call_operand.hbm [shape: f32[2,8,256], index: 3, kind: output, shape index: {}]
  %s4 = sld [smem:[#allocation0]]
  $region57: #{conv_kxbn.3} parent=0
    _
  %s6 = ssub.s32 1, %s4
  %s7 = scalar_select 0, %s6, %s4
  $region1: #{conv_kxbn.3} parent=0
    #allocation2 [shape = 'u8[24576]{0}', space=vmem, size = 0x6000, scoped, tag = 'input window, operand 0']
    #allocation3 [shape = 's32[2]{0}', space=sflag, size = 0x8, scoped, tag = 'scoped memory for conv_kxbn.3']
    #allocation4 [shape = 's32[2]{0}', space=sflag, size = 0x8, scoped, tag = 'scoped memory for conv_kxbn.3']
    #allocation5 [shape = 'u8[4096]{0}', space=vmem, size = 0x1000, scoped, tag = 'input window, operand 1, single buffered']
    #allocation6 [shape = 's32[1]{0}', space=sflag, size = 0x4, scoped, tag = 'scoped memory for conv_kxbn.3']
    #allocation7 [shape = 'u8[4096]{0}', space=vmem, size = 0x1000, scoped, tag = 'input window, operand 2, single buffered']
    #allocation8 [shape = 'u8[16384]{0}', space=vmem, size = 0x4000, scoped, tag = 'output window, operand 0']
    %8 = vsyncpa [#allocation3], 0
    %s9 = scalar_lea.sflag [#allocation3], 1
    %10 = vsyncpa %s9, 0
    %11 = vsyncpa [#allocation6], 0
    %12 = vsyncpa [#allocation4], 0
    %s13 = scalar_lea.sflag [#allocation4], 1
    %14 = vsyncpa %s13, 0
    loop: start=0, step=1, limit=4
    $region2: #{conv_kxbn.3} parent=1 // loop_pre_header
      _
    $region3: #{conv_kxbn.3} parent=1 // loop_header
      %s16 = sphi 0, %s20
      %p17 = scmp.ge.s32.totalorder %s16, 4
      %s26 = sphi 0, %s28
      %s29 = sphi 0, %s26
      %s30 = sphi 0, %s29
      %s46 = sphi 0, %s30
      %s50 = sphi 0, %s50
      %s52 = sphi 0, %s50
      %s53 = sphi 0, %s52
      %s67 = sphi 0, %s53
      %s71 = sphi 0, %s71
      %s73 = sphi 0, %s71
      %s74 = sphi 0, %s73
      %s88 = sphi 0, %s74
      %s94 = sphi 0, %s96
      %s97 = sphi 0, %s94
      %s98 = sphi 0, %s97
      %s114 = sphi 0, %s98
    $region4: #{conv_kxbn.3} parent=1 // loop_header_branch
      %19 = sbr.rel (%p17) target = $region8
    $region5: #{conv_kxbn.3} parent=1 // loop_body
      %s21 = ssub.s32 %s16, 1
      %s22 = ssub.s32 %s16, 2
      %s23 = sadd.s32 %s16, 1
      %s24 = ssub.s32 %s16, %s23
      %p25 = scmp.eq.s32.totalorder %s24, 0
      %s27 = sadd.s32 %s26, 1
      %s28 = scalar_select %p25, %s26, %s27
      %p31 = pneg %p25
      %p32 = scmp.eq.s32.totalorder %s16, 1
      %p33 = por %p31, %p32
      %p34 = scmp.ne.s32.totalorder %s26, %s29
      %p35 = scmp.eq.s32.totalorder %s16, 0
      %p36 = por %p34, %p35
      %p37 = scmp.ne.s32.totalorder %s26, %s29
      %p38 = scmp.eq.s32.totalorder %s21, 1
      %p39 = por %p37, %p38
      %p40 = scmp.ne.s32.totalorder %s29, %s30
      %p41 = scmp.eq.s32.totalorder %s21, 0
      %p42 = por %p40, %p41
      %p43 = scmp.ne.s32.totalorder %s29, %s30
      %p44 = scmp.eq.s32.totalorder %s22, 1
      %p45 = por %p43, %p44
      %p47 = scmp.ne.s32.totalorder %s30, %s46
      %p48 = scmp.eq.s32.totalorder %s22, 0
      %p49 = por %p47, %p48
      %s51 = sadd.s32 %s50, 1
      %p54 = scmp.eq.s32.totalorder %s16, 1
      %p55 = scmp.ne.s32.totalorder %s50, %s52
      %p56 = scmp.eq.s32.totalorder %s16, 0
      %p57 = por %p55, %p56
      %p58 = scmp.ne.s32.totalorder %s50, %s52
      %p59 = scmp.eq.s32.totalorder %s21, 1
      %p60 = por %p58, %p59
      %p61 = scmp.ne.s32.totalorder %s52, %s53
      %p62 = scmp.eq.s32.totalorder %s21, 0
      %p63 = por %p61, %p62
      %p64 = scmp.ne.s32.totalorder %s52, %s53
      %p65 = scmp.eq.s32.totalorder %s22, 1
      %p66 = por %p64, %p65
      %p68 = scmp.ne.s32.totalorder %s53, %s67
      %p69 = scmp.eq.s32.totalorder %s22, 0
      %p70 = por %p68, %p69
      %s72 = sadd.s32 %s71, 1
      %p75 = scmp.eq.s32.totalorder %s16, 1
      %p76 = scmp.ne.s32.totalorder %s71, %s73
      %p77 = scmp.eq.s32.totalorder %s16, 0
      %p78 = por %p76, %p77
      %p79 = scmp.ne.s32.totalorder %s71, %s73
      %p80 = scmp.eq.s32.totalorder %s21, 1
      %p81 = por %p79, %p80
      %p82 = scmp.ne.s32.totalorder %s73, %s74
      %p83 = scmp.eq.s32.totalorder %s21, 0
      %p84 = por %p82, %p83
      %p85 = scmp.ne.s32.totalorder %s73, %s74
      %p86 = scmp.eq.s32.totalorder %s22, 1
      %p87 = por %p85, %p86
      %p89 = scmp.ne.s32.totalorder %s74, %s88
      %p90 = scmp.eq.s32.totalorder %s22, 0
      %p91 = por %p89, %p90
      %s92 = ssub.s32 %s16, %s23
      %p93 = scmp.eq.s32.totalorder %s92, 0
      %s95 = sadd.s32 %s94, 1
      %s96 = scalar_select %p93, %s94, %s95
      %p99 = pneg %p93
      %p100 = scmp.eq.s32.totalorder %s16, 1
      %p101 = por %p99, %p100
      %p102 = scmp.ne.s32.totalorder %s94, %s97
      %p103 = scmp.eq.s32.totalorder %s16, 0
      %p104 = por %p102, %p103
      %p105 = scmp.ne.s32.totalorder %s94, %s97
      %p106 = scmp.eq.s32.totalorder %s21, 1
      %p107 = por %p105, %p106
      %p108 = scmp.ne.s32.totalorder %s97, %s98
      %p109 = scmp.eq.s32.totalorder %s21, 0
      %p110 = por %p108, %p109
      %p111 = scmp.ne.s32.totalorder %s97, %s98
      %p112 = scmp.eq.s32.totalorder %s22, 1
      %p113 = por %p111, %p112
      %p115 = scmp.ne.s32.totalorder %s98, %s114
      %p116 = scmp.eq.s32.totalorder %s22, 0
      %p117 = por %p115, %p116
      %p118 = scmp.le.s32.totalorder 1, %s16
      %p119 = scmp.lt.s32.totalorder %s16, 3
      %p120 = pnand %p118, %p119
      %p121 = pneg %p120
      // Predicated region
      $region9: #{conv_kxbn.3} parent=5 // pred_check
        _
      $region10: #{conv_kxbn.3} parent=5 // pred_check_branch
        %123 = sbr.rel (%p120) target = $region12
      $region11: #{conv_kxbn.3} parent=5 // pred_region
        %s124 = ssub.s32 %s16, 1
        // Predicated region
        $region13: #{conv_kxbn.3} parent=11 // pred_check
          %p125 = pneg %p63
        $region14: #{conv_kxbn.3} parent=11 // pred_check_branch
          %127 = sbr.rel (%p125) target = $region16
        $region15: #{conv_kxbn.3} parent=11 // pred_region
          %s129 = ssub.s32 128, 128
          %130 = vsyncadd [#allocation6], %s129
          %s132 = sshll.u32 [#allocation5], 4
          %s133 = int_to_ptr.vmem [resolvable:$true] %s132
          %135 = dma.hbm_to_vmem [thread:$0]  %s1, 128, %s133, [#allocation6]
        $region16: #{conv_kxbn.3} parent=11 // pred_fallthru
          _
        // Predicated region
        $region17: #{conv_kxbn.3} parent=11 // pred_check
          %p136 = pneg %p84
        $region18: #{conv_kxbn.3} parent=11 // pred_check_branch
          %138 = sbr.rel (%p136) target = $region20
        $region19: #{conv_kxbn.3} parent=11 // pred_region
          %s140 = ssub.s32 128, 128
          %141 = vsyncadd [#allocation6], %s140
          %s143 = sshll.u32 [#allocation7], 4
          %s144 = int_to_ptr.vmem [resolvable:$true] %s143
          %146 = dma.hbm_to_vmem [thread:$0]  %s2, 128, %s144, [#allocation6]
        $region20: #{conv_kxbn.3} parent=11 // pred_fallthru
          _
      $region12: #{conv_kxbn.3} parent=5 // pred_fallthru
        _
      %p147 = scmp.lt.s32.totalorder %s16, 2
      // Predicated region
      $region21: #{conv_kxbn.3} parent=5 // pred_check
        %p148 = pneg %p147
      $region22: #{conv_kxbn.3} parent=5 // pred_check_branch
        %150 = sbr.rel (%p148) target = $region24
      $region23: #{conv_kxbn.3} parent=5 // pred_region
        // Predicated region
        $region25: #{conv_kxbn.3} parent=23 // pred_check
          %p151 = pneg %p36
        $region26: #{conv_kxbn.3} parent=23 // pred_check_branch
          %153 = sbr.rel (%p151) target = $region28
        $region27: #{conv_kxbn.3} parent=23 // pred_region
          %s154 = sand.u32 %s26, 1
          %s155 = scalar_lea.sflag [#allocation3], %s154
          %s156 = sand.u32 %s26, 1
          %s157 = smul.addr %s156, 24
          %s158 = scalar_lea.vmem [#allocation2], %s157
          %s160 = ssub.s32 384, 384
          %161 = vsyncadd %s155, %s160
          %s162 = smul.addr %s16, 3
          %s163 = smul.addr %s162, 128
          %s164 = scalar_lea.hbm %s0, %s163
          %s166 = sshll.u32 %s158, 4
          %s167 = int_to_ptr.vmem [resolvable:$true] %s166
          %169 = dma.hbm_to_vmem [thread:$0]  %s164, 384, %s167, %s155
        $region28: #{conv_kxbn.3} parent=23 // pred_fallthru
          _
      $region24: #{conv_kxbn.3} parent=5 // pred_fallthru
        _
      %p170 = scmp.le.s32.totalorder 1, %s16
      %p171 = scmp.lt.s32.totalorder %s16, 3
      %p172 = pnand %p170, %p171
      %p173 = pneg %p172
      // Predicated region
      $region29: #{conv_kxbn.3} parent=5 // pred_check
        _
      $region30: #{conv_kxbn.3} parent=5 // pred_check_branch
        %175 = sbr.rel (%p172) target = $region32
      $region31: #{conv_kxbn.3} parent=5 // pred_region
        %s176 = ssub.s32 %s16, 1
        %s177 = sand.u32 %s29, 1
        %s178 = scalar_lea.sflag [#allocation3], %s177
        %s179 = sand.u32 %s29, 1
        %s180 = smul.addr %s179, 24
        %s181 = scalar_lea.vmem [#allocation2], %s180
        // Predicated region
        $region33: #{conv_kxbn.3} parent=31 // pred_check
          %p182 = pneg %p42
        $region34: #{conv_kxbn.3} parent=31 // pred_check_branch
          %184 = sbr.rel (%p182) target = $region36
        $region35: #{conv_kxbn.3} parent=31 // pred_region
          %185 = dma.done %s178, 384
        $region36: #{conv_kxbn.3} parent=31 // pred_fallthru
          _
        // Predicated region
        $region37: #{conv_kxbn.3} parent=31 // pred_check
          %p186 = pneg %p63
        $region38: #{conv_kxbn.3} parent=31 // pred_check_branch
          %188 = sbr.rel (%p186) target = $region40
        $region39: #{conv_kxbn.3} parent=31 // pred_region
          %189 = dma.done [#allocation6], 128
        $region40: #{conv_kxbn.3} parent=31 // pred_fallthru
          _
        // Predicated region
        $region41: #{conv_kxbn.3} parent=31 // pred_check
          %p190 = pneg %p84
        $region42: #{conv_kxbn.3} parent=31 // pred_check_branch
          %192 = sbr.rel (%p190) target = $region44
        $region43: #{conv_kxbn.3} parent=31 // pred_region
          %193 = dma.done [#allocation6], 128
        $region44: #{conv_kxbn.3} parent=31 // pred_fallthru
          _
        %s194 = sand.u32 %s29, 1
        %s195 = scalar_lea.sflag [#allocation3], %s194
        %s196 = sand.u32 %s29, 1
        %s197 = smul.addr %s196, 24
        %s198 = scalar_lea.vmem [#allocation2], %s197
        %p199 = pneg %p42
        %p200 = pneg %p39
        %p201 = pneg %p63
        %p202 = pneg %p60
        %p203 = pneg %p84
        %p204 = pneg %p81
        %p205 = pneg %p110
        %p206 = pneg %p107
        %s207 = sand.u32 %s97, 1
        %s208 = scalar_lea.sflag [#allocation4], %s207
        %s209 = sand.u32 %s97, 1
        %s210 = smul.addr %s209, 16
        %s211 = scalar_lea.vmem [#allocation8], %s210
        %v212 = vld [vmem:[%s181] sm:$0xff]
        %v213 = vld [vmem:[%s181 + $0x8] sm:$0xff]
        %v214 = vld [vmem:[%s181 + $0x10] sm:$0xff]
        %216 = vrot.lane.b32.xlu0 %v212, 126
        %v217 = vpop.permute.xlu0 %216
        %219 = vrot.lane.b32.xlu0 %v212, 124
        %v220 = vpop.permute.xlu0 %219
        %222 = vrot.lane.b32.xlu0 %v212, 122
        %v223 = vpop.permute.xlu0 %222
        %225 = vrot.lane.b32.xlu0 %v212, 120
        %v226 = vpop.permute.xlu0 %225
        %228 = vrot.lane.b32.xlu0 %v212, 118
        %v229 = vpop.permute.xlu0 %228
        %231 = vrot.lane.b32.xlu0 %v212, 116
        %v232 = vpop.permute.xlu0 %231
        %235 = vrot.lane.b32.xlu0 %v212, 114
        %v236 = vpop.permute.xlu0 %235
        %237 = vrot.lane.b32.xlu0 %v213, 114
        %v238 = vpop.permute.xlu0 %237
        %vm239 = vcmask 932864
        %v240 = vsel %vm239, %v236, %v238
        %242 = vrot.lane.b32.xlu0 %v213, 112
        %v243 = vpop.permute.xlu0 %242
        %245 = vrot.lane.b32.xlu0 %v213, 110
        %v246 = vpop.permute.xlu0 %245
        %248 = vrot.lane.b32.xlu0 %v213, 108
        %v249 = vpop.permute.xlu0 %248
        %251 = vrot.lane.b32.xlu0 %v213, 106
        %v252 = vpop.permute.xlu0 %251
        %254 = vrot.lane.b32.xlu0 %v213, 104
        %v255 = vpop.permute.xlu0 %254
        %257 = vrot.lane.b32.xlu0 %v213, 102
        %v258 = vpop.permute.xlu0 %257
        %261 = vrot.lane.b32.xlu0 %v213, 100
        %v262 = vpop.permute.xlu0 %261
        %263 = vrot.lane.b32.xlu0 %v214, 100
        %v264 = vpop.permute.xlu0 %263
        %vm265 = vcmask 818176
        %v266 = vsel %vm265, %v262, %v264
        %268 = vrot.lane.b32.xlu0 %v214, 98
        %v269 = vpop.permute.xlu0 %268
        %vm271 = vcmask 130048
        %v272 = vsel %vm271, %v212, %v217
        %vm273 = vcmask 261120
        %v274 = vsel %vm273, %v272, %v220
        %vm275 = vcmask 392192
        %v276 = vsel %vm275, %v274, %v223
        %vm277 = vcmask 523264
        %v278 = vsel %vm277, %v276, %v226
        %vm279 = vcmask 654336
        %v280 = vsel %vm279, %v278, %v229
        %vm281 = vcmask 785408
        %v282 = vsel %vm281, %v280, %v232
        %vm283 = vcmask 916480
        %v284 = vsel %vm283, %v282, %v240
        %v285 = vsel %vm271, %v243, %v246
        %v286 = vsel %vm273, %v285, %v249
        %v287 = vsel %vm275, %v286, %v252
        %v288 = vsel %vm277, %v287, %v255
        %v289 = vsel %vm279, %v288, %v258
        %v290 = vsel %vm281, %v289, %v266
        %v291 = vsel %vm283, %v290, %v269
        %v292 = vld [vmem:[#allocation5] sm:$0xff]
        %294 = vset.pattern.permute.xlu0 0
        %295 = vperm.xlu0 %294, %v292
        %v296 = vpop.permute.xlu0 %295
        %v298 = vmul.f32 %v284, %v296
        %v299 = vmul.f32 %v291, %v296
        %v300 = vld [vmem:[#allocation7] sm:$0xff]
        %302 = vset.pattern.permute.xlu0 0
        %303 = vperm.xlu0 %302, %v300
        %v304 = vpop.permute.xlu0 %303
        %v306 = vadd.f32 %v298, %v304
        %v307 = vadd.f32 %v299, %v304
        %308 = vst [vmem:[%s211] sm:$0xff] %v306
        %309 = vst [vmem:[%s211 + $0x8] sm:$0xff] %v307
        %s310 = sand.u32 %s97, 1
        %s311 = scalar_lea.sflag [#allocation4], %s310
        %s312 = sand.u32 %s97, 1
        %s313 = smul.addr %s312, 16
        %s314 = scalar_lea.vmem [#allocation8], %s313
        // Predicated region
        $region45: #{conv_kxbn.3} parent=31 // pred_check
          %p315 = pneg %p107
        $region46: #{conv_kxbn.3} parent=31 // pred_check_branch
          %317 = sbr.rel (%p315) target = $region48
        $region47: #{conv_kxbn.3} parent=31 // pred_region
          %s319 = ssub.s32 256, 256
          %320 = vsyncadd %s311, %s319
          %s321 = smul.addr %s21, 2
          %s322 = smul.addr %s321, 128
          %s323 = scalar_lea.hbm %s3, %s322
          %s325 = sshll.u32 %s314, 4
          %s326 = int_to_ptr.vmem [resolvable:$true] %s325
          %328 = dma.vmem_to_hbm [thread:$0]  %s326, 256, %s323, %s311
        $region48: #{conv_kxbn.3} parent=31 // pred_fallthru
          _
      $region32: #{conv_kxbn.3} parent=5 // pred_fallthru
        _
      %p329 = scmp.le.s32.totalorder 2, %s16
      // Predicated region
      $region49: #{conv_kxbn.3} parent=5 // pred_check
        %p330 = pneg %p329
      $region50: #{conv_kxbn.3} parent=5 // pred_check_branch
        %332 = sbr.rel (%p330) target = $region52
      $region51: #{conv_kxbn.3} parent=5 // pred_region
        %s333 = ssub.s32 %s16, 2
        // Predicated region
        $region53: #{conv_kxbn.3} parent=51 // pred_check
          %p334 = pneg %p113
        $region54: #{conv_kxbn.3} parent=51 // pred_check_branch
          %336 = sbr.rel (%p334) target = $region56
        $region55: #{conv_kxbn.3} parent=51 // pred_region
          %s337 = sand.u32 %s98, 1
          %s338 = scalar_lea.sflag [#allocation4], %s337
          %s339 = sand.u32 %s98, 1
          %s340 = smul.addr %s339, 16
          %s341 = scalar_lea.vmem [#allocation8], %s340
          %342 = dma.done %s338, 256
        $region56: #{conv_kxbn.3} parent=51 // pred_fallthru
          _
      $region52: #{conv_kxbn.3} parent=5 // pred_fallthru
        _
    $region6: #{conv_kxbn.3} parent=1 // loop_footer
      %s20 = sadd.s32 1, %s16
    $region7: #{conv_kxbn.3} parent=1 // loop_footer_branch
      %15 = sbr.rel target = $region3
    $region8: #{conv_kxbn.3} parent=1 // loop_exit
      _
    %343 = vsyncpa [#allocation3], 1
    %s344 = scalar_lea.sflag [#allocation3], 1
    %345 = vsyncpa %s344, 1
    %346 = vsyncpa [#allocation6], 1
    %347 = vsyncpa [#allocation4], 1
    %s348 = scalar_lea.sflag [#allocation4], 1
    %349 = vsyncpa %s348, 1

// kernel: conv_kxbn.2
$region0: #{conv_kxbn.2}
  #allocation0 [shape = 'u32[]', space=smem, size = 0x4, offset = 0x4, fixed_abs, tag = 'smem constant byte address 0x4 - core index']
  #allocation1 [shape = 'u32[144,128]{1,0:T(1,128)}', space=vmem, size = 0x12000, scoped, tag = 'internal scratch']
  #allocation2 [shape = 'f32[36,384]{1,0:T(8,128)}', space=vmem, size = 0xf000, scoped, tag = 'scratch operand']
  %s0 = inlined_call_operand.hbm [shape: f32[2,4,422], index: 0, kind: input, shape index: {}]
  %s1 = inlined_call_operand.hbm [shape: f32[8,36], index: 1, kind: input, shape index: {}]
  %s2 = inlined_call_operand.hbm [shape: f32[1,384], index: 2, kind: input, shape index: {}]
  %s3 = inlined_call_operand.hbm [shape: f32[2,8,384], index: 3, kind: output, shape index: {0}]
  %s4 = inlined_call_operand.hbm [shape: f32[2,8,2], index: 4, kind: output, shape index: {1}]
  %5 = xla_tuple %s3, %s4
  %s6 = sld [smem:[#allocation0]]
  $region65: #{conv_kxbn.2} parent=0
    _
  %s8 = ssub.s32 1, %s6
  %s9 = scalar_select 0, %s8, %s6
  $region1: #{conv_kxbn.2} parent=0
    #allocation3 [shape = 'u8[16384]{0}', space=vmem, size = 0x4000, scoped, tag = 'input window, operand 0']
    #allocation4 [shape = 's32[2]{0}', space=sflag, size = 0x8, scoped, tag = 'scoped memory for conv_kxbn.2']
    #allocation5 [shape = 's32[2]{0}', space=sflag, size = 0x8, scoped, tag = 'scoped memory for conv_kxbn.2']
    #allocation6 [shape = 'u8[4096]{0}', space=vmem, size = 0x1000, scoped, tag = 'input window, operand 1, single buffered']
    #allocation7 [shape = 's32[1]{0}', space=sflag, size = 0x4, scoped, tag = 'scoped memory for conv_kxbn.2']
    #allocation8 [shape = 'u8[1536]{0}', space=vmem, size = 0x800, scoped, tag = 'input window, operand 2, single buffered']
    #allocation9 [shape = 'u8[24576]{0}', space=vmem, size = 0x6000, scoped, tag = 'output window, operand 0']
    #allocation10 [shape = 'u8[8192]{0}', space=vmem, size = 0x2000, scoped, tag = 'output window, operand 1']
    #allocation11 [shape = 's32[2]{0}', space=sflag, size = 0x8, scoped, tag = 'scoped memory for conv_kxbn.2']
    %10 = vsyncpa [#allocation4], 0
    %s11 = scalar_lea.sflag [#allocation4], 1
    %12 = vsyncpa %s11, 0
    %13 = vsyncpa [#allocation7], 0
    %14 = vsyncpa [#allocation5], 0
    %s15 = scalar_lea.sflag [#allocation5], 1
    %16 = vsyncpa %s15, 0
    %17 = vsyncpa [#allocation11], 0
    %s18 = scalar_lea.sflag [#allocation11], 1
    %19 = vsyncpa %s18, 0
    loop: start=0, step=1, limit=4
    $region2: #{conv_kxbn.2} parent=1 // loop_pre_header
      _
    $region3: #{conv_kxbn.2} parent=1 // loop_header
      %s21 = sphi 0, %s25
      %p22 = scmp.ge.s32.totalorder %s21, 4
      %s31 = sphi 0, %s33
      %s34 = sphi 0, %s31
      %s35 = sphi 0, %s34
      %s51 = sphi 0, %s35
      %s55 = sphi 0, %s55
      %s57 = sphi 0, %s55
      %s58 = sphi 0, %s57
      %s72 = sphi 0, %s58
      %s76 = sphi 0, %s76
      %s78 = sphi 0, %s76
      %s79 = sphi 0, %s78
      %s93 = sphi 0, %s79
      %s99 = sphi 0, %s101
      %s102 = sphi 0, %s99
      %s103 = sphi 0, %s102
      %s119 = sphi 0, %s103
      %s125 = sphi 0, %s127
      %s128 = sphi 0, %s125
      %s129 = sphi 0, %s128
      %s145 = sphi 0, %s129
    $region4: #{conv_kxbn.2} parent=1 // loop_header_branch
      %24 = sbr.rel (%p22) target = $region8
    $region5: #{conv_kxbn.2} parent=1 // loop_body
      %s26 = ssub.s32 %s21, 1
      %s27 = ssub.s32 %s21, 2
      %s28 = sadd.s32 %s21, 1
      %s29 = ssub.s32 %s21, %s28
      %p30 = scmp.eq.s32.totalorder %s29, 0
      %s32 = sadd.s32 %s31, 1
      %s33 = scalar_select %p30, %s31, %s32
      %p36 = pneg %p30
      %p37 = scmp.eq.s32.totalorder %s21, 1
      %p38 = por %p36, %p37
      %p39 = scmp.ne.s32.totalorder %s31, %s34
      %p40 = scmp.eq.s32.totalorder %s21, 0
      %p41 = por %p39, %p40
      %p42 = scmp.ne.s32.totalorder %s31, %s34
      %p43 = scmp.eq.s32.totalorder %s26, 1
      %p44 = por %p42, %p43
      %p45 = scmp.ne.s32.totalorder %s34, %s35
      %p46 = scmp.eq.s32.totalorder %s26, 0
      %p47 = por %p45, %p46
      %p48 = scmp.ne.s32.totalorder %s34, %s35
      %p49 = scmp.eq.s32.totalorder %s27, 1
      %p50 = por %p48, %p49
      %p52 = scmp.ne.s32.totalorder %s35, %s51
      %p53 = scmp.eq.s32.totalorder %s27, 0
      %p54 = por %p52, %p53
      %s56 = sadd.s32 %s55, 1
      %p59 = scmp.eq.s32.totalorder %s21, 1
      %p60 = scmp.ne.s32.totalorder %s55, %s57
      %p61 = scmp.eq.s32.totalorder %s21, 0
      %p62 = por %p60, %p61
      %p63 = scmp.ne.s32.totalorder %s55, %s57
      %p64 = scmp.eq.s32.totalorder %s26, 1
      %p65 = por %p63, %p64
      %p66 = scmp.ne.s32.totalorder %s57, %s58
      %p67 = scmp.eq.s32.totalorder %s26, 0
      %p68 = por %p66, %p67
      %p69 = scmp.ne.s32.totalorder %s57, %s58
      %p70 = scmp.eq.s32.totalorder %s27, 1
      %p71 = por %p69, %p70
      %p73 = scmp.ne.s32.totalorder %s58, %s72
      %p74 = scmp.eq.s32.totalorder %s27, 0
      %p75 = por %p73, %p74
      %s77 = sadd.s32 %s76, 1
      %p80 = scmp.eq.s32.totalorder %s21, 1
      %p81 = scmp.ne.s32.totalorder %s76, %s78
      %p82 = scmp.eq.s32.totalorder %s21, 0
      %p83 = por %p81, %p82
      %p84 = scmp.ne.s32.totalorder %s76, %s78
      %p85 = scmp.eq.s32.totalorder %s26, 1
      %p86 = por %p84, %p85
      %p87 = scmp.ne.s32.totalorder %s78, %s79
      %p88 = scmp.eq.s32.totalorder %s26, 0
      %p89 = por %p87, %p88
      %p90 = scmp.ne.s32.totalorder %s78, %s79
      %p91 = scmp.eq.s32.totalorder %s27, 1
      %p92 = por %p90, %p91
      %p94 = scmp.ne.s32.totalorder %s79, %s93
      %p95 = scmp.eq.s32.totalorder %s27, 0
      %p96 = por %p94, %p95
      %s97 = ssub.s32 %s21, %s28
      %p98 = scmp.eq.s32.totalorder %s97, 0
      %s100 = sadd.s32 %s99, 1
      %s101 = scalar_select %p98, %s99, %s100
      %p104 = pneg %p98
      %p105 = scmp.eq.s32.totalorder %s21, 1
      %p106 = por %p104, %p105
      %p107 = scmp.ne.s32.totalorder %s99, %s102
      %p108 = scmp.eq.s32.totalorder %s21, 0
      %p109 = por %p107, %p108
      %p110 = scmp.ne.s32.totalorder %s99, %s102
      %p111 = scmp.eq.s32.totalorder %s26, 1
      %p112 = por %p110, %p111
      %p113 = scmp.ne.s32.totalorder %s102, %s103
      %p114 = scmp.eq.s32.totalorder %s26, 0
      %p115 = por %p113, %p114
      %p116 = scmp.ne.s32.totalorder %s102, %s103
      %p117 = scmp.eq.s32.totalorder %s27, 1
      %p118 = por %p116, %p117
      %p120 = scmp.ne.s32.totalorder %s103, %s119
      %p121 = scmp.eq.s32.totalorder %s27, 0
      %p122 = por %p120, %p121
      %s123 = ssub.s32 %s21, %s28
      %p124 = scmp.eq.s32.totalorder %s123, 0
      %s126 = sadd.s32 %s125, 1
      %s127 = scalar_select %p124, %s125, %s126
      %p130 = pneg %p124
      %p131 = scmp.eq.s32.totalorder %s21, 1
      %p132 = por %p130, %p131
      %p133 = scmp.ne.s32.totalorder %s125, %s128
      %p134 = scmp.eq.s32.totalorder %s21, 0
      %p135 = por %p133, %p134
      %p136 = scmp.ne.s32.totalorder %s125, %s128
      %p137 = scmp.eq.s32.totalorder %s26, 1
      %p138 = por %p136, %p137
      %p139 = scmp.ne.s32.totalorder %s128, %s129
      %p140 = scmp.eq.s32.totalorder %s26, 0
      %p141 = por %p139, %p140
      %p142 = scmp.ne.s32.totalorder %s128, %s129
      %p143 = scmp.eq.s32.totalorder %s27, 1
      %p144 = por %p142, %p143
      %p146 = scmp.ne.s32.totalorder %s129, %s145
      %p147 = scmp.eq.s32.totalorder %s27, 0
      %p148 = por %p146, %p147
      %p149 = scmp.le.s32.totalorder 1, %s21
      %p150 = scmp.lt.s32.totalorder %s21, 3
      %p151 = pnand %p149, %p150
      %p152 = pneg %p151
      // Predicated region
      $region9: #{conv_kxbn.2} parent=5 // pred_check
        _
      $region10: #{conv_kxbn.2} parent=5 // pred_check_branch
        %154 = sbr.rel (%p151) target = $region12
      $region11: #{conv_kxbn.2} parent=5 // pred_region
        %s155 = ssub.s32 %s21, 1
        // Predicated region
        $region13: #{conv_kxbn.2} parent=11 // pred_check
          %p156 = pneg %p68
        $region14: #{conv_kxbn.2} parent=11 // pred_check_branch
          %158 = sbr.rel (%p156) target = $region16
        $region15: #{conv_kxbn.2} parent=11 // pred_region
          %s160 = ssub.s32 128, 128
          %161 = vsyncadd [#allocation7], %s160
          %s163 = sshll.u32 [#allocation6], 4
          %s164 = int_to_ptr.vmem [resolvable:$true] %s163
          %166 = dma.hbm_to_vmem [thread:$0]  %s1, 128, %s164, [#allocation7]
        $region16: #{conv_kxbn.2} parent=11 // pred_fallthru
          _
        // Predicated region
        $region17: #{conv_kxbn.2} parent=11 // pred_check
          %p167 = pneg %p89
        $region18: #{conv_kxbn.2} parent=11 // pred_check_branch
          %169 = sbr.rel (%p167) target = $region20
        $region19: #{conv_kxbn.2} parent=11 // pred_region
          %s171 = ssub.s32 48, 48
          %172 = vsyncadd [#allocation7], %s171
          %s174 = sshll.u32 [#allocation8], 4
          %s175 = int_to_ptr.vmem [resolvable:$true] %s174
          %177 = dma.hbm_to_vmem [thread:$0]  %s2, 48, %s175, [#allocation7]
        $region20: #{conv_kxbn.2} parent=11 // pred_fallthru
          _
      $region12: #{conv_kxbn.2} parent=5 // pred_fallthru
        _
      %p178 = scmp.lt.s32.totalorder %s21, 2
      // Predicated region
      $region21: #{conv_kxbn.2} parent=5 // pred_check
        %p179 = pneg %p178
      $region22: #{conv_kxbn.2} parent=5 // pred_check_branch
        %181 = sbr.rel (%p179) target = $region24
      $region23: #{conv_kxbn.2} parent=5 // pred_region
        // Predicated region
        $region25: #{conv_kxbn.2} parent=23 // pred_check
          %p182 = pneg %p41
        $region26: #{conv_kxbn.2} parent=23 // pred_check_branch
          %184 = sbr.rel (%p182) target = $region28
        $region27: #{conv_kxbn.2} parent=23 // pred_region
          %s185 = sand.u32 %s31, 1
          %s186 = scalar_lea.sflag [#allocation4], %s185
          %s187 = sand.u32 %s31, 1
          %s188 = smul.addr %s187, 16
          %s189 = scalar_lea.vmem [#allocation3], %s188
          %s191 = ssub.s32 256, 256
          %192 = vsyncadd %s186, %s191
          %s193 = smul.addr %s21, 4
          %s194 = smul.addr %s193, 64
          %s195 = scalar_lea.hbm %s0, %s194
          %s197 = sshll.u32 %s189, 4
          %s198 = int_to_ptr.vmem [resolvable:$true] %s197
          %200 = dma.hbm_to_vmem [thread:$0]  %s195, 256, %s198, %s186
        $region28: #{conv_kxbn.2} parent=23 // pred_fallthru
          _
      $region24: #{conv_kxbn.2} parent=5 // pred_fallthru
        _
      %p201 = scmp.le.s32.totalorder 1, %s21
      %p202 = scmp.lt.s32.totalorder %s21, 3
      %p203 = pnand %p201, %p202
      %p204 = pneg %p203
      // Predicated region
      $region29: #{conv_kxbn.2} parent=5 // pred_check
        _
      $region30: #{conv_kxbn.2} parent=5 // pred_check_branch
        %206 = sbr.rel (%p203) target = $region32
      $region31: #{conv_kxbn.2} parent=5 // pred_region
        %s207 = ssub.s32 %s21, 1
        %s208 = sand.u32 %s34, 1
        %s209 = scalar_lea.sflag [#allocation4], %s208
        %s210 = sand.u32 %s34, 1
        %s211 = smul.addr %s210, 16
        %s212 = scalar_lea.vmem [#allocation3], %s211
        // Predicated region
        $region33: #{conv_kxbn.2} parent=31 // pred_check
          %p213 = pneg %p47
        $region34: #{conv_kxbn.2} parent=31 // pred_check_branch
          %215 = sbr.rel (%p213) target = $region36
        $region35: #{conv_kxbn.2} parent=31 // pred_region
          %216 = dma.done %s209, 256
        $region36: #{conv_kxbn.2} parent=31 // pred_fallthru
          _
        // Predicated region
        $region37: #{conv_kxbn.2} parent=31 // pred_check
          %p217 = pneg %p68
        $region38: #{conv_kxbn.2} parent=31 // pred_check_branch
          %219 = sbr.rel (%p217) target = $region40
        $region39: #{conv_kxbn.2} parent=31 // pred_region
          %220 = dma.done [#allocation7], 128
        $region40: #{conv_kxbn.2} parent=31 // pred_fallthru
          _
        // Predicated region
        $region41: #{conv_kxbn.2} parent=31 // pred_check
          %p221 = pneg %p89
        $region42: #{conv_kxbn.2} parent=31 // pred_check_branch
          %223 = sbr.rel (%p221) target = $region44
        $region43: #{conv_kxbn.2} parent=31 // pred_region
          %224 = dma.done [#allocation7], 48
        $region44: #{conv_kxbn.2} parent=31 // pred_fallthru
          _
        %s225 = sand.u32 %s34, 1
        %s226 = scalar_lea.sflag [#allocation4], %s225
        %s227 = sand.u32 %s34, 1
        %s228 = smul.addr %s227, 16
        %s229 = scalar_lea.vmem [#allocation3], %s228
        %p230 = pneg %p47
        %p231 = pneg %p44
        %p232 = pneg %p68
        %p233 = pneg %p65
        %p234 = pneg %p89
        %p235 = pneg %p86
        %p236 = pneg %p115
        %p237 = pneg %p112
        %s238 = sand.u32 %s102, 1
        %s239 = scalar_lea.sflag [#allocation5], %s238
        %s240 = sand.u32 %s102, 1
        %s241 = smul.addr %s240, 24
        %s242 = scalar_lea.vmem [#allocation9], %s241
        %p243 = pneg %p141
        %p244 = pneg %p138
        %s245 = sand.u32 %s128, 1
        %s246 = scalar_lea.sflag [#allocation11], %s245
        %s247 = sand.u32 %s128, 1
        %s248 = smul.addr %s247, 8
        %s249 = scalar_lea.vmem [#allocation10], %s248
        %v250 = vld [vmem:[%s212] sm:$0xff]
        %v251 = vld [vmem:[%s212 + $0x8] sm:$0xff]
        %v254 = vcombine.high %v250, %v250
        %256 = vst [vmem:[#allocation2] sm:$0xf] %v250
        %257 = vst [vmem:[#allocation2 + $0x8] sm:$0xf] %v254
        %258 = vst [vmem:[#allocation2 + $0x10] sm:$0xf] %v251
        %v259 = vcombine.low %v250, %v250
        %v260 = vcombine.low %v251, %v251
        %261 = vrot.lane.b32.xlu0 %v259, 127
        %v262 = vpop.permute.xlu0 %261
        %263 = vrot.lane.b32.xlu0 %v250, 127
        %v264 = vpop.permute.xlu0 %263
        %265 = vrot.lane.b32.xlu0 %v260, 127
        %v266 = vpop.permute.xlu0 %265
        %267 = vrot.lane.b32.xlu0 %v251, 127
        %v268 = vpop.permute.xlu0 %267
        %vm269 = vcmask 1039360
        %v270 = vsel %vm269, %v262, %v264
        %v271 = vsel %vm269, %v264, %v266
        %v272 = vsel %vm269, %v266, %v268
        %276 = vst [vmem:[#allocation2] sm:$0xf0] %v270
        %277 = vst [vmem:[#allocation2 + $0x8] sm:$0xf0] %v271
        %278 = vst [vmem:[#allocation2 + $0x10] sm:$0xf0] %v272
        %v279 = vcombine.high %v251, %v251
        %280 = vrot.lane.b32.xlu0 %v250, 126
        %v281 = vpop.permute.xlu0 %280
        %282 = vrot.lane.b32.xlu0 %v254, 126
        %v283 = vpop.permute.xlu0 %282
        %284 = vrot.lane.b32.xlu0 %v251, 126
        %v285 = vpop.permute.xlu0 %284
        %286 = vrot.lane.b32.xlu0 %v279, 126
        %v287 = vpop.permute.xlu0 %286
        %vm288 = vcmask 1031168
        %v289 = vsel %vm288, %v281, %v283
        %v290 = vsel %vm288, %v283, %v285
        %v291 = vsel %vm288, %v285, %v287
        %295 = vst [vmem:[#allocation2 + $0x18] sm:$0xf] %v289
        %296 = vst [vmem:[#allocation2 + $0x20] sm:$0xf] %v290
        %297 = vst [vmem:[#allocation2 + $0x28] sm:$0xf] %v291
        %298 = vrot.lane.b32.xlu0 %v259, 110
        %v299 = vpop.permute.xlu0 %298
        %300 = vrot.lane.b32.xlu0 %v250, 110
        %v301 = vpop.permute.xlu0 %300
        %302 = vrot.lane.b32.xlu0 %v260, 110
        %v303 = vpop.permute.xlu0 %302
        %304 = vrot.lane.b32.xlu0 %v251, 110
        %v305 = vpop.permute.xlu0 %304
        %vm306 = vcmask 900096
        %v307 = vsel %vm306, %v299, %v301
        %v308 = vsel %vm306, %v301, %v303
        %v309 = vsel %vm306, %v303, %v305
        %313 = vst [vmem:[#allocation2 + $0x18] sm:$0xf0] %v307
        %314 = vst [vmem:[#allocation2 + $0x20] sm:$0xf0] %v308
        %315 = vst [vmem:[#allocation2 + $0x28] sm:$0xf0] %v309
        %316 = vrot.lane.b32.xlu0 %v250, 109
        %v317 = vpop.permute.xlu0 %316
        %318 = vrot.lane.b32.xlu0 %v254, 109
        %v319 = vpop.permute.xlu0 %318
        %320 = vrot.lane.b32.xlu0 %v251, 109
        %v321 = vpop.permute.xlu0 %320
        %322 = vrot.lane.b32.xlu0 %v279, 109
        %v323 = vpop.permute.xlu0 %322
        %vm324 = vcmask 891904
        %v325 = vsel %vm324, %v317, %v319
        %v326 = vsel %vm324, %v319, %v321
        %v327 = vsel %vm324, %v321, %v323
        %331 = vst [vmem:[#allocation2 + $0x30] sm:$0xf] %v325
        %332 = vst [vmem:[#allocation2 + $0x38] sm:$0xf] %v326
        %333 = vst [vmem:[#allocation2 + $0x40] sm:$0xf] %v327
        %334 = vrot.lane.b32.xlu0 %v259, 108
        %v335 = vpop.permute.xlu0 %334
        %336 = vrot.lane.b32.xlu0 %v250, 108
        %v337 = vpop.permute.xlu0 %336
        %338 = vrot.lane.b32.xlu0 %v260, 108
        %v339 = vpop.permute.xlu0 %338
        %340 = vrot.lane.b32.xlu0 %v251, 108
        %v341 = vpop.permute.xlu0 %340
        %vm342 = vcmask 883712
        %v343 = vsel %vm342, %v335, %v337
        %v344 = vsel %vm342, %v337, %v339
        %v345 = vsel %vm342, %v339, %v341
        %349 = vst [vmem:[#allocation2 + $0x30] sm:$0xf0] %v343
        %350 = vst [vmem:[#allocation2 + $0x38] sm:$0xf0] %v344
        %351 = vst [vmem:[#allocation2 + $0x40] sm:$0xf0] %v345
        %352 = vrot.lane.b32.xlu0 %v250, 92
        %v353 = vpop.permute.xlu0 %352
        %354 = vrot.lane.b32.xlu0 %v254, 92
        %v355 = vpop.permute.xlu0 %354
        %356 = vrot.lane.b32.xlu0 %v251, 92
        %v357 = vpop.permute.xlu0 %356
        %358 = vrot.lane.b32.xlu0 %v279, 92
        %v359 = vpop.permute.xlu0 %358
        %vm360 = vcmask 752640
        %v361 = vsel %vm360, %v353, %v355
        %v362 = vsel %vm360, %v355, %v357
        %v363 = vsel %vm360, %v357, %v359
        %367 = vst [vmem:[#allocation2 + $0x48] sm:$0xf] %v361
        %368 = vst [vmem:[#allocation2 + $0x50] sm:$0xf] %v362
        %369 = vst [vmem:[#allocation2 + $0x58] sm:$0xf] %v363
        %370 = vrot.lane.b32.xlu0 %v259, 91
        %v371 = vpop.permute.xlu0 %370
        %372 = vrot.lane.b32.xlu0 %v250, 91
        %v373 = vpop.permute.xlu0 %372
        %374 = vrot.lane.b32.xlu0 %v260, 91
        %v375 = vpop.permute.xlu0 %374
        %376 = vrot.lane.b32.xlu0 %v251, 91
        %v377 = vpop.permute.xlu0 %376
        %vm378 = vcmask 744448
        %v379 = vsel %vm378, %v371, %v373
        %v380 = vsel %vm378, %v373, %v375
        %v381 = vsel %vm378, %v375, %v377
        %385 = vst [vmem:[#allocation2 + $0x48] sm:$0xf0] %v379
        %386 = vst [vmem:[#allocation2 + $0x50] sm:$0xf0] %v380
        %387 = vst [vmem:[#allocation2 + $0x58] sm:$0xf0] %v381
        %388 = vrot.lane.b32.xlu0 %v250, 90
        %v389 = vpop.permute.xlu0 %388
        %390 = vrot.lane.b32.xlu0 %v254, 90
        %v391 = vpop.permute.xlu0 %390
        %392 = vrot.lane.b32.xlu0 %v251, 90
        %v393 = vpop.permute.xlu0 %392
        %394 = vrot.lane.b32.xlu0 %v279, 90
        %v395 = vpop.permute.xlu0 %394
        %vm396 = vcmask 736256
        %v397 = vsel %vm396, %v389, %v391
        %v398 = vsel %vm396, %v391, %v393
        %v399 = vsel %vm396, %v393, %v395
        %403 = vst [vmem:[#allocation2 + $0x60] sm:$0xf] %v397
        %404 = vst [vmem:[#allocation2 + $0x68] sm:$0xf] %v398
        %405 = vst [vmem:[#allocation2 + $0x70] sm:$0xf] %v399
        %v406 = vld [vmem:[#allocation6] sm:$0xff]
        %v407 = vld [vmem:[#allocation2] sm:$0xff]
        %v408 = vld [vmem:[#allocation2 + $0x8] sm:$0xff]
        %v409 = vld [vmem:[#allocation2 + $0x10] sm:$0xff]
        %v410 = vld [vmem:[#allocation2 + $0x18] sm:$0xff]
        %v411 = vld [vmem:[#allocation2 + $0x20] sm:$0xff]
        %v412 = vld [vmem:[#allocation2 + $0x28] sm:$0xff]
        %v413 = vld [vmem:[#allocation2 + $0x30] sm:$0xff]
        %v414 = vld [vmem:[#allocation2 + $0x38] sm:$0xff]
        %v415 = vld [vmem:[#allocation2 + $0x40] sm:$0xff]
        %v416 = vld [vmem:[#allocation2 + $0x48] sm:$0xff]
        %v417 = vld [vmem:[#allocation2 + $0x50] sm:$0xff]
        %v418 = vld [vmem:[#allocation2 + $0x58] sm:$0xff]
        %v419 = vld [vmem:[#allocation2 + $0x60] sm:$0xf]
        %v420 = vld [vmem:[#allocation2 + $0x68] sm:$0xf]
        %v421 = vld [vmem:[#allocation2 + $0x70] sm:$0xf]
        %vm422 = vcmask 293888
        %v424 = vsel %vm422, %v406, 0
        %vm426 = vcmask 1043456
        %v428 = vsel %vm426, %v419, 0
        %v431 = vsel %vm426, %v420, 0
        %v434 = vsel %vm426, %v421, 0
        %436 = vmatprep.subr.mxu0 %v408
        %437 = vmatpush1.msra.mxu0 %v407
        %438 = vmatprep.subr.mxu0 %v411
        %439 = vmatpush1.msra.mxu0 %v410
        %440 = vmatprep.subr.mxu0 %v414
        %441 = vmatpush1.msra.mxu0 %v413
        %442 = vmatprep.subr.mxu0 %v417
        %443 = vmatpush1.msra.mxu0 %v416
        %444 = vmatprep.subr.mxu0 %v431
        %445 = vmatpush1.msra.mxu0 %v428
        %446 = vmatprep.subr.mxu0 0.0
        %447 = vmatpush1.msra.mxu0 0.0
        %448 = vmatprep.subr.mxu0 0.0
        %449 = vmatpush1.msra.mxu0 0.0
        %450 = vmatprep.subr.mxu0 0.0
        %451 = vmatpush1.msra.mxu0 0.0
        %452 = vmatprep.subr.mxu0 0.0
        %453 = vmatpush1.msra.mxu0 0.0
        %454 = vmatprep.subr.mxu0 0.0
        %455 = vmatpush1.msra.mxu0 0.0
        %456 = vmatprep.subr.mxu0 0.0
        %457 = vmatpush1.msra.mxu0 0.0
        %458 = vmatprep.subr.mxu0 0.0
        %459 = vmatpush1.msra.mxu0 0.0
        %460 = vmatprep.subr.mxu0 0.0
        %461 = vmatpush1.msra.mxu0 0.0
        %462 = vmatprep.subr.mxu0 0.0
        %463 = vmatpush1.msra.mxu0 0.0
        %464 = vmatprep.subr.mxu0 0.0
        %465 = vmatpush1.msra.mxu0 0.0
        %466 = vmatprep.subr.mxu0 0.0
        %467 = vmatpush1.msra.mxu0 0.0
        %468 = vmatprep.subr.mxu0 0.0
        %469 = vmatpush1.msra.mxu0 0.0
        %470 = vmatprep.subr.mxu0 0.0
        %471 = vmatpush1.msra.mxu0 0.0
        %472 = vmatprep.subr.mxu0 0.0
        %473 = vmatpush1.msra.mxu0 0.0
        %474 = vmatprep.subr.mxu0 0.0
        %475 = vmatpush1.msra.mxu0 0.0
        %476 = vmatprep.subr.mxu0 0.0
        %477 = vmatpush1.msra.mxu0 0.0
        %478 = vmatprep.subr.mxu0 0.0
        %479 = vmatpush1.msra.mxu0 0.0
        %480 = vmatprep.subr.mxu0 0.0
        %481 = vmatpush1.msra.mxu0 0.0
        %482 = vmatprep.subr.mxu0 0.0
        %483 = vmatpush1.msra.mxu0 0.0
        %484 = vmatprep.subr.mxu0 0.0
        %485 = vmatpush1.msra.mxu0 0.0
        %486 = vmatprep.subr.mxu0 0.0
        %487 = vmatpush1.msra.mxu0 0.0
        %488 = vmatprep.subr.mxu0 0.0
        %489 = vmatpush1.msra.mxu0 0.0
        %490 = vmatprep.subr.mxu0 0.0
        %491 = vmatpush1.msra.mxu0 0.0
        %492 = vmatprep.subr.mxu0 0.0
        %493 = vmatpush1.msra.mxu0 0.0
        %494 = vmatprep.subr.mxu0 0.0
        %495 = vmatpush1.msra.mxu0 0.0
        %496 = vmatprep.subr.mxu0 0.0
        %497 = vmatpush1.msra.mxu0 0.0
        %498 = vmatprep.subr.mxu0 0.0
        %499 = vmatpush1.msra.mxu0 0.0
        %500 = vmatprep.mubr.f32.mxu0 0.0
        %501 = vmatmul.mubr.f32.gmra.mrb[0].mxu0 %v424
        %v502 = vpop.f32.mrb[0].mxu0
        %v503 = vadd.f32 0.0, %v502
        %v504 = vpop.f32.mrb[0].mxu0
        %v505 = vadd.f32 0.0, %v504
        %506 = vdwg.mxu0
        %507 = vmatprep.subr.mxu0 0.0
        %508 = vmatpush1.msra.mxu0 %v409
        %509 = vmatprep.subr.mxu0 0.0
        %510 = vmatpush1.msra.mxu0 %v412
        %511 = vmatprep.subr.mxu0 0.0
        %512 = vmatpush1.msra.mxu0 %v415
        %513 = vmatprep.subr.mxu0 0.0
        %514 = vmatpush1.msra.mxu0 %v418
        %515 = vmatprep.subr.mxu0 0.0
        %516 = vmatpush1.msra.mxu0 %v434
        %517 = vmatprep.subr.mxu0 0.0
        %518 = vmatpush1.msra.mxu0 0.0
        %519 = vmatprep.subr.mxu0 0.0
        %520 = vmatpush1.msra.mxu0 0.0
        %521 = vmatprep.subr.mxu0 0.0
        %522 = vmatpush1.msra.mxu0 0.0
        %523 = vmatprep.subr.mxu0 0.0
        %524 = vmatpush1.msra.mxu0 0.0
        %525 = vmatprep.subr.mxu0 0.0
        %526 = vmatpush1.msra.mxu0 0.0
        %527 = vmatprep.subr.mxu0 0.0
        %528 = vmatpush1.msra.mxu0 0.0
        %529 = vmatprep.subr.mxu0 0.0
        %530 = vmatpush1.msra.mxu0 0.0
        %531 = vmatprep.subr.mxu0 0.0
        %532 = vmatpush1.msra.mxu0 0.0
        %533 = vmatprep.subr.mxu0 0.0
        %534 = vmatpush1.msra.mxu0 0.0
        %535 = vmatprep.subr.mxu0 0.0
        %536 = vmatpush1.msra.mxu0 0.0
        %537 = vmatprep.subr.mxu0 0.0
        %538 = vmatpush1.msra.mxu0 0.0
        %539 = vmatprep.subr.mxu0 0.0
        %540 = vmatpush1.msra.mxu0 0.0
        %541 = vmatprep.subr.mxu0 0.0
        %542 = vmatpush1.msra.mxu0 0.0
        %543 = vmatprep.subr.mxu0 0.0
        %544 = vmatpush1.msra.mxu0 0.0
        %545 = vmatprep.subr.mxu0 0.0
        %546 = vmatpush1.msra.mxu0 0.0
        %547 = vmatprep.subr.mxu0 0.0
        %548 = vmatpush1.msra.mxu0 0.0
        %549 = vmatprep.subr.mxu0 0.0
        %550 = vmatpush1.msra.mxu0 0.0
        %551 = vmatprep.subr.mxu0 0.0
        %552 = vmatpush1.msra.mxu0 0.0
        %553 = vmatprep.subr.mxu0 0.0
        %554 = vmatpush1.msra.mxu0 0.0
        %555 = vmatprep.subr.mxu0 0.0
        %556 = vmatpush1.msra.mxu0 0.0
        %557 = vmatprep.subr.mxu0 0.0
        %558 = vmatpush1.msra.mxu0 0.0
        %559 = vmatprep.subr.mxu0 0.0
        %560 = vmatpush1.msra.mxu0 0.0
        %561 = vmatprep.subr.mxu0 0.0
        %562 = vmatpush1.msra.mxu0 0.0
        %563 = vmatprep.subr.mxu0 0.0
        %564 = vmatpush1.msra.mxu0 0.0
        %565 = vmatprep.subr.mxu0 0.0
        %566 = vmatpush1.msra.mxu0 0.0
        %567 = vmatprep.subr.mxu0 0.0
        %568 = vmatpush1.msra.mxu0 0.0
        %569 = vmatprep.subr.mxu0 0.0
        %570 = vmatpush1.msra.mxu0 0.0
        %571 = vmatprep.mubr.f32.mxu0 0.0
        %572 = vmatmul.mubr.f32.gmra.mrb[0].mxu0 %v424
        %v573 = vpop.f32.mrb[0].mxu0
        %v574 = vadd.f32 0.0, %v573
        %v575 = vpop.f32.mrb[0].mxu0
        %576 = vdwg.mxu0
        %577 = vst [vmem:[%s242] sm:$0xff] %v503
        %578 = vst [vmem:[%s242 + $0x8] sm:$0xff] %v505
        %579 = vst [vmem:[%s242 + $0x10] sm:$0xff] %v574
        %v580 = vld [vmem:[#allocation8] sm:$0x7]
        %v582 = vlaneseq
        %v583 = vshrl.u32 %v582, 7
        %v584 = vsub.s32 0, %v583
        %v585 = vrot.slane %v580, %v584
        %v586 = vlaneseq
        %v587 = vshrl.u32 %v586, 7
        %v588 = vsub.s32 1, %v587
        %v589 = vrot.slane %v580, %v588
        %v590 = vlaneseq
        %v591 = vshrl.u32 %v590, 7
        %v592 = vsub.s32 2, %v591
        %v593 = vrot.slane %v580, %v592
        %v597 = vmul.f32 %v503, %v585
        %v598 = vmul.f32 %v505, %v589
        %v599 = vmul.f32 %v574, %v593
        %v600 = vadd.f32 %v597, %v598
        %v601 = vadd.f32 %v600, %v599
        %602 = vadd.xlane.f32.xlu0 %v601
        %v603 = vpop.xlane.xlu0 %602
        %v604 = vmul.f32 %v597, %v503
        %v605 = vmul.f32 %v598, %v505
        %v606 = vmul.f32 %v599, %v574
        %v607 = vadd.f32 %v604, %v605
        %v608 = vadd.f32 %v607, %v606
        %609 = vadd.xlane.f32.xlu0 %v608
        %v610 = vpop.xlane.xlu0 %609
        %vm611 = vcmask 7168
        %v612 = vsel %vm611, %v603, %v610
        %vm613 = vcmask 15360
        %614 = vst.msk [vmem:[%s249] sm:$0xff] %vm613, %v612
        %s615 = sand.u32 %s102, 1
        %s616 = scalar_lea.sflag [#allocation5], %s615
        %s617 = sand.u32 %s102, 1
        %s618 = smul.addr %s617, 24
        %s619 = scalar_lea.vmem [#allocation9], %s618
        %s620 = sand.u32 %s128, 1
        %s621 = scalar_lea.sflag [#allocation11], %s620
        %s622 = sand.u32 %s128, 1
        %s623 = smul.addr %s622, 8
        %s624 = scalar_lea.vmem [#allocation10], %s623
        // Predicated region
        $region45: #{conv_kxbn.2} parent=31 // pred_check
          %p625 = pneg %p112
        $region46: #{conv_kxbn.2} parent=31 // pred_check_branch
          %627 = sbr.rel (%p625) target = $region48
        $region47: #{conv_kxbn.2} parent=31 // pred_region
          %s629 = ssub.s32 384, 384
          %630 = vsyncadd %s616, %s629
          %s631 = smul.addr %s26, 3
          %s632 = smul.addr %s631, 128
          %s633 = scalar_lea.hbm %s3, %s632
          %s635 = sshll.u32 %s619, 4
          %s636 = int_to_ptr.vmem [resolvable:$true] %s635
          %638 = dma.vmem_to_hbm [thread:$0]  %s636, 384, %s633, %s616
        $region48: #{conv_kxbn.2} parent=31 // pred_fallthru
          _
        // Predicated region
        $region49: #{conv_kxbn.2} parent=31 // pred_check
          %p639 = pneg %p138
        $region50: #{conv_kxbn.2} parent=31 // pred_check_branch
          %641 = sbr.rel (%p639) target = $region52
        $region51: #{conv_kxbn.2} parent=31 // pred_region
          %s643 = ssub.s32 128, 128
          %644 = vsyncadd %s621, %s643
          %s645 = smul.addr %s26, 128
          %s646 = scalar_lea.hbm %s4, %s645
          %s648 = sshll.u32 %s624, 4
          %s649 = int_to_ptr.vmem [resolvable:$true] %s648
          %651 = dma.vmem_to_hbm [thread:$0]  %s649, 128, %s646, %s621
        $region52: #{conv_kxbn.2} parent=31 // pred_fallthru
          _
      $region32: #{conv_kxbn.2} parent=5 // pred_fallthru
        _
      %p652 = scmp.le.s32.totalorder 2, %s21
      // Predicated region
      $region53: #{conv_kxbn.2} parent=5 // pred_check
        %p653 = pneg %p652
      $region54: #{conv_kxbn.2} parent=5 // pred_check_branch
        %655 = sbr.rel (%p653) target = $region56
      $region55: #{conv_kxbn.2} parent=5 // pred_region
        %s656 = ssub.s32 %s21, 2
        // Predicated region
        $region57: #{conv_kxbn.2} parent=55 // pred_check
          %p657 = pneg %p118
        $region58: #{conv_kxbn.2} parent=55 // pred_check_branch
          %659 = sbr.rel (%p657) target = $region60
        $region59: #{conv_kxbn.2} parent=55 // pred_region
          %s660 = sand.u32 %s103, 1
          %s661 = scalar_lea.sflag [#allocation5], %s660
          %s662 = sand.u32 %s103, 1
          %s663 = smul.addr %s662, 24
          %s664 = scalar_lea.vmem [#allocation9], %s663
          %665 = dma.done %s661, 384
        $region60: #{conv_kxbn.2} parent=55 // pred_fallthru
          _
        // Predicated region
        $region61: #{conv_kxbn.2} parent=55 // pred_check
          %p666 = pneg %p144
        $region62: #{conv_kxbn.2} parent=55 // pred_check_branch
          %668 = sbr.rel (%p666) target = $region64
        $region63: #{conv_kxbn.2} parent=55 // pred_region
          %s669 = sand.u32 %s129, 1
          %s670 = scalar_lea.sflag [#allocation11], %s669
          %s671 = sand.u32 %s129, 1
          %s672 = smul.addr %s671, 8
          %s673 = scalar_lea.vmem [#allocation10], %s672
          %674 = dma.done %s670, 128
        $region64: #{conv_kxbn.2} parent=55 // pred_fallthru
          _
      $region56: #{conv_kxbn.2} parent=5 // pred_fallthru
        _
    $region6: #{conv_kxbn.2} parent=1 // loop_footer
      %s25 = sadd.s32 1, %s21
    $region7: #{conv_kxbn.2} parent=1 // loop_footer_branch
      %20 = sbr.rel target = $region3
    $region8: #{conv_kxbn.2} parent=1 // loop_exit
      _
    %675 = vsyncpa [#allocation4], 1
    %s676 = scalar_lea.sflag [#allocation4], 1
    %677 = vsyncpa %s676, 1
    %678 = vsyncpa [#allocation7], 1
    %679 = vsyncpa [#allocation5], 1
    %s680 = scalar_lea.sflag [#allocation5], 1
    %681 = vsyncpa %s680, 1
    %682 = vsyncpa [#allocation11], 1
    %s683 = scalar_lea.sflag [#allocation11], 1
    %684 = vsyncpa %s683, 1

</llo_original>
